<compile_context>
chip_gen: v6e
topology: v6e:2x2x1
jax: 0.10.0
libtpu: 0.0.40
codegen_flags: <defaults>
</compile_context>

<pallas_src>
import math
import jax
import jax.numpy as jnp
from jax.experimental import pallas as pl
from jax.experimental.pallas import tpu as pltpu

# ---- small, forward-consistent shapes ---------------------------------------
B, T, D = 2, 16, 128          # batch, w2v frames, fin_channel
P       = 3                   # pool_head   (matches "pool_3" in the module path)
NHEADS  = 4                   # heads inside each AttentionalPool
NCLASS  = 4                   # emotion classes
BT, PD, PH = B * T, P * D, P * NHEADS
DH = D // NHEADS


def emotion_kernel(h_ref, fc1_w_ref, wq_ref, bq_ref,
                   wkv_ref, bkv_ref, hbig_ref, hbigT_ref, pooled_ref):
    # ---- relu + fc1 over all B*T rows at once (fc1 bias folded into bq'/bkv') ----
    x = jnp.maximum(h_ref[...], 0.0)                                         # (BT, D) bf16
    y = jnp.dot(x, fc1_w_ref[...], preferred_element_type=jnp.float32)       # (BT, D) f32
    y_bf = y.astype(jnp.bfloat16)

    # ---- fused K|V projections for all P pool heads: one wide matmul ---------
    kv = jnp.dot(y_bf, wkv_ref[...],
                 preferred_element_type=jnp.float32) + bkv_ref[...]          # (BT, 2*PD)
    K = kv[:, :PD]                                                           # (BT, PD)
    V = kv[:, PD:]                                                           # (BT, PD)

    # ---- per-batch max-over-time query ('max' pool mode): batched reduction ---
    q_all = jnp.max(y.reshape(B, T, D), axis=1)                              # (B, D) f32
    # fused Q projections for all P pool heads (1/sqrt(d_head) folded into wq/bq)
    Q = jnp.dot(q_all.astype(jnp.bfloat16), wq_ref[...],
                preferred_element_type=jnp.float32) + bq_ref[...]            # (B, PD)

    # ---- per-head scores for all 3 pools via block-diagonal head selector ----
    kq = (K.reshape(B, T, PD) * Q[:, None, :]).reshape(BT, PD)               # (BT, PD)
    scores = jnp.dot(kq.astype(jnp.bfloat16), hbig_ref[...],
                     preferred_element_type=jnp.float32)                     # (BT, PH)

    # softmax over time within each batch segment (batched over B, f32)
    s3 = scores.reshape(B, T, PH)
    m = jnp.max(s3, axis=1, keepdims=True)
    e = jnp.exp(s3 - m)
    inv = pl.reciprocal(jnp.sum(e, axis=1, keepdims=True), approx=True)
    att = (e * inv).reshape(BT, PH)                                          # (BT, PH)

    # expand head attention back to channels, weight V, pool over time --------
    att_full = jnp.dot(att.astype(jnp.bfloat16), hbigT_ref[...],
                       preferred_element_type=jnp.float32)                   # (BT, PD)
    weighted = att_full * V                                                  # (BT, PD)
    pooled_ref[...] = jnp.sum(weighted.reshape(B, T, PD), axis=1)            # (B, PD) lane-dense


_VMEM_SPEC = pl.BlockSpec(memory_space=pltpu.MemorySpace.VMEM)


def _emotion_forward(hidden, kparams, head, ans):
    """hidden: (B, T, D) w2v last hidden states; ans: (B,) int32 labels."""
    w_final, b_final = head
    # bf16 activations: halves the kernel's input DMA; relu runs in bf16 in-kernel.
    h2d = hidden.reshape(BT, D).astype(jnp.bfloat16)

    pooled = pl.pallas_call(
        emotion_kernel,
        out_shape=jax.ShapeDtypeStruct((B, PD), jnp.float32),
        in_specs=[_VMEM_SPEC] * (1 + len(kparams)),
        out_specs=_VMEM_SPEC,
        compiler_params=pltpu.CompilerParams(vmem_limit_bytes=32 * 1024 * 1024),
    )(h2d, *kparams)

    # folded epilogue: (Wo_p * id_filter_p), bo_p and the hs linear collapsed into
    # one (P*D, 4) matrix => logits; cross-entropy on the tiny (B, 4) output. All of
    # this fuses into the same jitted XLA program (no extra dispatches).
    logits = pooled @ w_final + b_final                                      # (B, NCLASS)
    logp = logits - jax.nn.logsumexp(logits, axis=-1, keepdims=True)
    loss = -jnp.mean(jnp.take_along_axis(logp, ans[:, None], axis=-1))
    return loss, [logits], [ans], jnp.zeros((1,), jnp.float32)


emotion_forward = jax.jit(_emotion_forward)


def init_params(key):
    ks = jax.random.split(key, 13)
    s = 0.02
    fc1_w = jax.random.normal(ks[0], (D, D), jnp.float32) * s
    fc1_b = jax.random.normal(ks[1], (1, D), jnp.float32) * s
    wq = jax.random.normal(ks[2], (P, D, D), jnp.float32) * s
    bq = jax.random.normal(ks[3], (P, 1, D), jnp.float32) * s
    wk = jax.random.normal(ks[4], (P, D, D), jnp.float32) * s
    bk = jax.random.normal(ks[5], (P, 1, D), jnp.float32) * s
    wv = jax.random.normal(ks[6], (P, D, D), jnp.float32) * s
    bv = jax.random.normal(ks[7], (P, 1, D), jnp.float32) * s
    wo = jax.random.normal(ks[8], (P, D, D), jnp.float32) * s
    bo = jax.random.normal(ks[9], (P, 1, D), jnp.float32) * s
    idf = jax.random.normal(ks[10], (P, 1, D), jnp.float32)          # id_filter ~ randn
    hs_w = jax.random.normal(ks[11], (D, NCLASS), jnp.float32) * s
    hs_b = jax.random.normal(ks[12], (1, NCLASS), jnp.float32) * s

    scale = 1.0 / math.sqrt(DH)

    # ---- one-time host-side fusions / folds ----------------------------------
    # Q projections (score scale folded in), K|V projections concatenated wide.
    wq_cat = jnp.concatenate([wq[p] * scale for p in range(P)], axis=1)      # (D, PD)
    bq_cat = jnp.concatenate([bq[p] * scale for p in range(P)], axis=1)      # (1, PD)
    wk_cat = jnp.concatenate([wk[p] for p in range(P)], axis=1)              # (D, PD)
    bk_cat = jnp.concatenate([bk[p] for p in range(P)], axis=1)              # (1, PD)
    wv_cat = jnp.concatenate([wv[p] for p in range(P)], axis=1)              # (D, PD)
    bv_cat = jnp.concatenate([bv[p] for p in range(P)], axis=1)              # (1, PD)
    wkv_cat = jnp.concatenate([wk_cat, wv_cat], axis=1)                      # (D, 2*PD)
    bkv_cat = jnp.concatenate([bk_cat, bv_cat], axis=1)                      # (1, 2*PD)

    # fold fc1 bias through the downstream projections (bias commutes with the
    # per-channel max-over-time, so Q/K/V all see the same folded bias).
    bq_fold = fc1_b @ wq_cat + bq_cat                                        # (1, PD)
    bkv_fold = fc1_b @ wkv_cat + bkv_cat                                     # (1, 2*PD)

    # block-diagonal channel->head selector covering all P pools at once
    hsel = (jnp.arange(D)[:, None] // DH ==
            jnp.arange(NHEADS)[None, :]).astype(jnp.float32)                 # (D, NHEADS)
    hbig = jnp.zeros((PD, PH), jnp.float32)
    for p in range(P):
        hbig = hbig.at[p * D:(p + 1) * D, p * NHEADS:(p + 1) * NHEADS].set(hsel)
    hbigT = hbig.T                                                           # (PH, PD)

    # fold id_filter, bo and the hs linear head into a single epilogue matrix
    # (matches the module: feat = sum_p (pool_p @ Wo_p + bo_p) * idf_p, then hs(D->4))
    wo_scaled = jnp.concatenate([wo[p] * idf[p] for p in range(P)], axis=0)  # (PD, D)
    b_scaled = sum(bo[p] * idf[p] for p in range(P))                         # (1, D)
    w_final = wo_scaled @ hs_w                                               # (PD, NCLASS)
    b_final = b_scaled @ hs_w + hs_b                                         # (1, NCLASS)

    bf = jnp.bfloat16
    kparams = (fc1_w.astype(bf),
               wq_cat.astype(bf), bq_fold,
               wkv_cat.astype(bf), bkv_fold,
               hbig.astype(bf), hbigT.astype(bf))
    head = (w_final, b_final)
    return kparams, head


if __name__ == "__main__":
    key = jax.random.PRNGKey(0)
    k_h, k_a, k_p = jax.random.split(key, 3)
    hidden = jax.random.normal(k_h, (B, T, D), jnp.float32)          # stand-in for w2v features
    ans = jax.random.randint(k_a, (B,), 0, NCLASS, jnp.int32)
    kparams, head = init_params(k_p)

    loss, outs, labels, zero = emotion_forward(hidden, kparams, head, ans)
    jax.block_until_ready(loss)
    jax.block_until_ready(outs[0])
    print("KERNEL_OK")
</pallas_src>

<mosaic_0001>
module attributes {stable_mosaic.version = 11 : i64} {
  func.func @emotion_kernel(%arg0: memref<32x128xbf16, #tpu.memory_space<vmem>>, %arg1: memref<128x128xbf16, #tpu.memory_space<vmem>>, %arg2: memref<128x384xbf16, #tpu.memory_space<vmem>>, %arg3: memref<1x384xf32, #tpu.memory_space<vmem>>, %arg4: memref<128x768xbf16, #tpu.memory_space<vmem>>, %arg5: memref<1x768xf32, #tpu.memory_space<vmem>>, %arg6: memref<384x12xbf16, #tpu.memory_space<vmem>>, %arg7: memref<12x384xbf16, #tpu.memory_space<vmem>>, %arg8: memref<2x384xf32, #tpu.memory_space<vmem>>) attributes {dimension_semantics = [], scalar_prefetch = 0 : i64, scratch_operands = 0 : i64, tpu.core_type = #tpu.core_type<tc>} {
    %c0 = arith.constant 0 : index
    %c0_0 = arith.constant 0 : index
    %0 = vector.load %arg0[%c0, %c0_0] : memref<32x128xbf16, #tpu.memory_space<vmem>>, vector<32x128xbf16>
    %cst = arith.constant 0.000000e+00 : bf16
    %1 = vector.broadcast %cst : bf16 to vector<32x128xbf16>
    %2 = arith.maximumf %0, %1 : vector<32x128xbf16>
    %c0_1 = arith.constant 0 : index
    %c0_2 = arith.constant 0 : index
    %3 = vector.load %arg1[%c0_1, %c0_2] : memref<128x128xbf16, #tpu.memory_space<vmem>>, vector<128x128xbf16>
    %cst_3 = arith.constant dense<0.000000e+00> : vector<32x128xf32>
    %4 = tpu.matmul %2, %3, %cst_3 {dimension_numbers = #tpu.dot_dimension_numbers<[1], [0], [0], [1], [0, 0, 1, 1], [], []>} : vector<32x128xbf16>, vector<128x128xbf16>, vector<32x128xf32> -> vector<32x128xf32>
    %5 = arith.truncf %4 : vector<32x128xf32> to vector<32x128xbf16>
    %c0_4 = arith.constant 0 : index
    %c0_5 = arith.constant 0 : index
    %6 = vector.load %arg4[%c0_4, %c0_5] : memref<128x768xbf16, #tpu.memory_space<vmem>>, vector<128x768xbf16>
    %cst_6 = arith.constant dense<0.000000e+00> : vector<32x768xf32>
    %7 = tpu.matmul %5, %6, %cst_6 {dimension_numbers = #tpu.dot_dimension_numbers<[1], [0], [0], [1], [0, 0, 1, 1], [], []>} : vector<32x128xbf16>, vector<128x768xbf16>, vector<32x768xf32> -> vector<32x768xf32>
    %c0_7 = arith.constant 0 : index
    %c0_8 = arith.constant 0 : index
    %8 = vector.load %arg5[%c0_7, %c0_8] : memref<1x768xf32, #tpu.memory_space<vmem>>, vector<1x768xf32>
    %9 = vector.broadcast %8 : vector<1x768xf32> to vector<32x768xf32>
    %10 = arith.addf %7, %9 : vector<32x768xf32>
    %11 = vector.extract_strided_slice %10 {offsets = [0, 0], sizes = [32, 384], strides = [1, 1]} : vector<32x768xf32> to vector<32x384xf32>
    %12 = vector.extract_strided_slice %10 {offsets = [0, 384], sizes = [32, 384], strides = [1, 1]} : vector<32x768xf32> to vector<32x384xf32>
    %13 = vector.shape_cast %4 : vector<32x128xf32> to vector<2x16x128xf32>
    %cst_9 = arith.constant dense<0xFF800000> : vector<2x128xf32>
    %14 = vector.multi_reduction <maximumf>, %13, %cst_9 [1] : vector<2x16x128xf32> to vector<2x128xf32>
    %15 = arith.truncf %14 : vector<2x128xf32> to vector<2x128xbf16>
    %c0_10 = arith.constant 0 : index
    %c0_11 = arith.constant 0 : index
    %16 = vector.load %arg2[%c0_10, %c0_11] : memref<128x384xbf16, #tpu.memory_space<vmem>>, vector<128x384xbf16>
    %cst_12 = arith.constant dense<0.000000e+00> : vector<2x384xf32>
    %17 = tpu.matmul %15, %16, %cst_12 {dimension_numbers = #tpu.dot_dimension_numbers<[1], [0], [0], [1], [0, 0, 1, 1], [], []>} : vector<2x128xbf16>, vector<128x384xbf16>, vector<2x384xf32> -> vector<2x384xf32>
    %c0_13 = arith.constant 0 : index
    %c0_14 = arith.constant 0 : index
    %18 = vector.load %arg3[%c0_13, %c0_14] : memref<1x384xf32, #tpu.memory_space<vmem>>, vector<1x384xf32>
    %19 = vector.broadcast %18 : vector<1x384xf32> to vector<2x384xf32>
    %20 = arith.addf %17, %19 : vector<2x384xf32>
    %21 = vector.shape_cast %11 : vector<32x384xf32> to vector<2x16x384xf32>
    %22 = vector.shape_cast %20 : vector<2x384xf32> to vector<2x1x384xf32>
    %23 = vector.broadcast %22 : vector<2x1x384xf32> to vector<2x16x384xf32>
    %24 = arith.mulf %21, %23 : vector<2x16x384xf32>
    %25 = vector.shape_cast %24 : vector<2x16x384xf32> to vector<32x384xf32>
    %26 = arith.truncf %25 : vector<32x384xf32> to vector<32x384xbf16>
    %c0_15 = arith.constant 0 : index
    %c0_16 = arith.constant 0 : index
    %27 = vector.load %arg6[%c0_15, %c0_16] : memref<384x12xbf16, #tpu.memory_space<vmem>>, vector<384x12xbf16>
    %cst_17 = arith.constant dense<0.000000e+00> : vector<32x12xf32>
    %28 = tpu.matmul %26, %27, %cst_17 {dimension_numbers = #tpu.dot_dimension_numbers<[1], [0], [0], [1], [0, 0, 1, 1], [], []>} : vector<32x384xbf16>, vector<384x12xbf16>, vector<32x12xf32> -> vector<32x12xf32>
    %29 = vector.shape_cast %28 : vector<32x12xf32> to vector<2x16x12xf32>
    %cst_18 = arith.constant dense<0xFF800000> : vector<2x12xf32>
    %30 = vector.multi_reduction <maximumf>, %29, %cst_18 [1] : vector<2x16x12xf32> to vector<2x12xf32>
    %31 = vector.shape_cast %30 : vector<2x12xf32> to vector<2x1x12xf32>
    %32 = vector.broadcast %31 : vector<2x1x12xf32> to vector<2x16x12xf32>
    %33 = arith.subf %29, %32 : vector<2x16x12xf32>
    %34 = math.exp %33 : vector<2x16x12xf32>
    %cst_19 = arith.constant dense<0.000000e+00> : vector<2x12xf32>
    %35 = vector.multi_reduction <add>, %34, %cst_19 [1] : vector<2x16x12xf32> to vector<2x12xf32>
    %36 = vector.shape_cast %35 : vector<2x12xf32> to vector<2x1x12xf32>
    %37 = tpu.reciprocal %36 {approx = true} : vector<2x1x12xf32> -> vector<2x1x12xf32>
    %38 = vector.broadcast %37 : vector<2x1x12xf32> to vector<2x16x12xf32>
    %39 = arith.mulf %34, %38 : vector<2x16x12xf32>
    %40 = vector.shape_cast %39 : vector<2x16x12xf32> to vector<32x12xf32>
    %41 = arith.truncf %40 : vector<32x12xf32> to vector<32x12xbf16>
    %c0_20 = arith.constant 0 : index
    %c0_21 = arith.constant 0 : index
    %42 = vector.load %arg7[%c0_20, %c0_21] : memref<12x384xbf16, #tpu.memory_space<vmem>>, vector<12x384xbf16>
    %cst_22 = arith.constant dense<0.000000e+00> : vector<32x384xf32>
    %43 = tpu.matmul %41, %42, %cst_22 {dimension_numbers = #tpu.dot_dimension_numbers<[1], [0], [0], [1], [0, 0, 1, 1], [], []>} : vector<32x12xbf16>, vector<12x384xbf16>, vector<32x384xf32> -> vector<32x384xf32>
    %44 = arith.mulf %43, %12 : vector<32x384xf32>
    %45 = vector.shape_cast %44 : vector<32x384xf32> to vector<2x16x384xf32>
    %cst_23 = arith.constant dense<0.000000e+00> : vector<2x384xf32>
    %46 = vector.multi_reduction <add>, %45, %cst_23 [1] : vector<2x16x384xf32> to vector<2x384xf32>
    %c0_24 = arith.constant 0 : index
    %c0_25 = arith.constant 0 : index
    %47 = vector.load %arg8[%c0_24, %c0_25] : memref<2x384xf32, #tpu.memory_space<vmem>>, vector<2x384xf32>
    tpu.vector_store %arg8[%c0_24, %c0_25], %46 {strides = array<i32>} : memref<2x384xf32, #tpu.memory_space<vmem>>, vector<2x384xf32>,
    return
  }
}

</mosaic_0001>

<llo_original>
// kernel: _emotion_forward.1
$region0: #{_emotion_forward.1}
  #allocation0 [shape = 'u32[]', space=smem, size = 0x4, offset = 0x4, fixed_abs, tag = 'smem constant byte address 0x4 - core index']
  #allocation1 [shape = 'u32[144,128]{1,0:T(1,128)}', space=vmem, size = 0x12000, scoped, tag = 'internal scratch']
  %s0 = inlined_call_operand.vmem [shape: bf16[32,128], index: 0, kind: input, shape index: {}]
  %s1 = inlined_call_operand.vmem [shape: bf16[128,128], index: 1, kind: input, shape index: {}]
  %s2 = inlined_call_operand.vmem [shape: bf16[128,384], index: 2, kind: input, shape index: {}]
  %s3 = inlined_call_operand.vmem [shape: f32[1,384], index: 3, kind: input, shape index: {}]
  %s4 = inlined_call_operand.hbm [shape: bf16[128,768], index: 4, kind: input, shape index: {}]
  %s5 = inlined_call_operand.vmem [shape: f32[1,768], index: 5, kind: input, shape index: {}]
  %s6 = inlined_call_operand.vmem [shape: bf16[384,12], index: 6, kind: input, shape index: {}]
  %s7 = inlined_call_operand.hbm [shape: bf16[12,384], index: 7, kind: input, shape index: {}]
  %s8 = inlined_call_operand.vmem [shape: f32[2,384], index: 8, kind: output, shape index: {}]
  %s9 = sld [smem:[#allocation0]]
  $region50: #{_emotion_forward.1} parent=0
    _
  %s11 = ssub.s32 1, %s9
  %s12 = scalar_select 0, %s11, %s9
  $region1: #{_emotion_forward.1} parent=0
    #allocation2 [shape = 'u8[196608]{0}', space=vmem, size = 0x30000, scoped, tag = 'input window, operand 4, single buffered']
    #allocation3 [shape = 's32[1]{0}', space=sflag, size = 0x4, scoped, tag = 'scoped memory for _emotion_forward.1']
    #allocation4 [shape = 'u8[12288]{0}', space=vmem, size = 0x3000, scoped, tag = 'input window, operand 7, single buffered']
    #allocation5 [shape = 's32[1]{0}', space=sflag, size = 0x4, scoped, tag = 'scoped memory for _emotion_forward.1']
    %13 = vsyncpa [#allocation3], 0
    %14 = vsyncpa [#allocation5], 0
    // Predicated region
    $region2: #{_emotion_forward.1} parent=1 // pred_check
      _
    $region3: #{_emotion_forward.1} parent=1 // pred_check_branch
      %16 = sbr.rel (0) target = $region5
    $region4: #{_emotion_forward.1} parent=1 // pred_region
      _
    $region5: #{_emotion_forward.1} parent=1 // pred_fallthru
      _
    // Predicated region
    $region6: #{_emotion_forward.1} parent=1 // pred_check
      _
    $region7: #{_emotion_forward.1} parent=1 // pred_check_branch
      %18 = sbr.rel (0) target = $region9
    $region8: #{_emotion_forward.1} parent=1 // pred_region
      _
    $region9: #{_emotion_forward.1} parent=1 // pred_fallthru
      _
    // Predicated region
    $region10: #{_emotion_forward.1} parent=1 // pred_check
      _
    $region11: #{_emotion_forward.1} parent=1 // pred_check_branch
      %20 = sbr.rel (0) target = $region13
    $region12: #{_emotion_forward.1} parent=1 // pred_region
      _
    $region13: #{_emotion_forward.1} parent=1 // pred_fallthru
      _
    // Predicated region
    $region14: #{_emotion_forward.1} parent=1 // pred_check
      _
    $region15: #{_emotion_forward.1} parent=1 // pred_check_branch
      %22 = sbr.rel (0) target = $region17
    $region16: #{_emotion_forward.1} parent=1 // pred_region
      _
    $region17: #{_emotion_forward.1} parent=1 // pred_fallthru
      _
    // Predicated region
    $region18: #{_emotion_forward.1} parent=1 // pred_check
      _
    $region19: #{_emotion_forward.1} parent=1 // pred_check_branch
      %24 = sbr.rel (0) target = $region21
    $region20: #{_emotion_forward.1} parent=1 // pred_region
      %s26 = ssub.s32 6144, 6144
      %27 = vsyncadd [#allocation3], %s26
      %s28 = sshll.u32 [#allocation2], 4
      %s29 = int_to_ptr.vmem [resolvable:$true] %s28
      %34 = dma.hbm_to_vmem [thread:$0]  %s4, 6144, %s29, [#allocation3], 384, 384, 24
    $region21: #{_emotion_forward.1} parent=1 // pred_fallthru
      _
    // Predicated region
    $region22: #{_emotion_forward.1} parent=1 // pred_check
      _
    $region23: #{_emotion_forward.1} parent=1 // pred_check_branch
      %36 = sbr.rel (0) target = $region25
    $region24: #{_emotion_forward.1} parent=1 // pred_region
      _
    $region25: #{_emotion_forward.1} parent=1 // pred_fallthru
      _
    // Predicated region
    $region26: #{_emotion_forward.1} parent=1 // pred_check
      _
    $region27: #{_emotion_forward.1} parent=1 // pred_check_branch
      %38 = sbr.rel (0) target = $region29
    $region28: #{_emotion_forward.1} parent=1 // pred_region
      _
    $region29: #{_emotion_forward.1} parent=1 // pred_fallthru
      _
    // Predicated region
    $region30: #{_emotion_forward.1} parent=1 // pred_check
      _
    $region31: #{_emotion_forward.1} parent=1 // pred_check_branch
      %40 = sbr.rel (0) target = $region33
    $region32: #{_emotion_forward.1} parent=1 // pred_region
      %s42 = ssub.s32 384, 384
      %43 = vsyncadd [#allocation5], %s42
      %s44 = sshll.u32 [#allocation4], 4
      %s45 = int_to_ptr.vmem [resolvable:$true] %s44
      %50 = dma.hbm_to_vmem [thread:$0]  %s7, 384, %s45, [#allocation5], 192, 192, 12
    $region33: #{_emotion_forward.1} parent=1 // pred_fallthru
      _
    // Predicated region
    $region34: #{_emotion_forward.1} parent=1 // pred_check
      _
    $region35: #{_emotion_forward.1} parent=1 // pred_check_branch
      %52 = sbr.rel (0) target = $region37
    $region36: #{_emotion_forward.1} parent=1 // pred_region
      %53 = dma.done [#allocation3], 6144
    $region37: #{_emotion_forward.1} parent=1 // pred_fallthru
      _
    // Predicated region
    $region38: #{_emotion_forward.1} parent=1 // pred_check
      _
    $region39: #{_emotion_forward.1} parent=1 // pred_check_branch
      %55 = sbr.rel (0) target = $region41
    $region40: #{_emotion_forward.1} parent=1 // pred_region
      %56 = dma.done [#allocation5], 384
    $region41: #{_emotion_forward.1} parent=1 // pred_fallthru
      _
    %v58 = vld [vmem:[%s0] sm:$0xf]
    %v59 = vld [vmem:[%s0 + $0x4] sm:$0xf]
    %v60 = vld [vmem:[%s0 + $0x8] sm:$0xf]
    %v61 = vld [vmem:[%s0 + $0xc] sm:$0xf]
    %v62 = vmax.bf16 %v58, 0
    %v63 = vmax.bf16 %v59, 0
    %v64 = vmax.bf16 %v60, 0
    %v65 = vmax.bf16 %v61, 0
    %v66 = vld [vmem:[%s1] sm:$0xf]
    %v67 = vld [vmem:[%s1 + $0x4] sm:$0xf]
    %v68 = vld [vmem:[%s1 + $0x8] sm:$0xf]
    %v69 = vld [vmem:[%s1 + $0xc] sm:$0xf]
    %v70 = vld [vmem:[%s1 + $0x10] sm:$0xf]
    %v71 = vld [vmem:[%s1 + $0x14] sm:$0xf]
    %v72 = vld [vmem:[%s1 + $0x18] sm:$0xf]
    %v73 = vld [vmem:[%s1 + $0x1c] sm:$0xf]
    %v74 = vld [vmem:[%s1 + $0x20] sm:$0xf]
    %v75 = vld [vmem:[%s1 + $0x24] sm:$0xf]
    %v76 = vld [vmem:[%s1 + $0x28] sm:$0xf]
    %v77 = vld [vmem:[%s1 + $0x2c] sm:$0xf]
    %v78 = vld [vmem:[%s1 + $0x30] sm:$0xf]
    %v79 = vld [vmem:[%s1 + $0x34] sm:$0xf]
    %v80 = vld [vmem:[%s1 + $0x38] sm:$0xf]
    %v81 = vld [vmem:[%s1 + $0x3c] sm:$0xf]
    %v86 = vunpack.c.l.b16 %v62
    %v87 = vunpack.c.l.b16 %v63
    %v88 = vunpack.c.l.b16 %v64
    %v89 = vunpack.c.l.b16 %v65
    %v90 = vpack.c.b16 %v87, %v86
    %v91 = vpack.c.b16 %v89, %v88
    %v110 = vunpack.c.l.b16 %v66
    %v111 = vunpack.c.l.b16 %v67
    %v112 = vunpack.c.l.b16 %v68
    %v113 = vunpack.c.l.b16 %v69
    %v114 = vunpack.c.l.b16 %v70
    %v115 = vunpack.c.l.b16 %v71
    %v116 = vunpack.c.l.b16 %v72
    %v117 = vunpack.c.l.b16 %v73
    %v118 = vunpack.c.l.b16 %v74
    %v119 = vunpack.c.l.b16 %v75
    %v120 = vunpack.c.l.b16 %v76
    %v121 = vunpack.c.l.b16 %v77
    %v122 = vunpack.c.l.b16 %v78
    %v123 = vunpack.c.l.b16 %v79
    %v124 = vunpack.c.l.b16 %v80
    %v125 = vunpack.c.l.b16 %v81
    %v126 = vpack.c.b16 %v111, %v110
    %v127 = vpack.c.b16 %v113, %v112
    %v128 = vpack.c.b16 %v115, %v114
    %v129 = vpack.c.b16 %v117, %v116
    %v130 = vpack.c.b16 %v119, %v118
    %v131 = vpack.c.b16 %v121, %v120
    %v132 = vpack.c.b16 %v123, %v122
    %v133 = vpack.c.b16 %v125, %v124
    %142 = vmatprep.subr.bf16.mxu0 0
    %143 = vmatpush1.bf16.msra.mxu0 %v133
    %144 = vmatprep.subr.bf16.mxu0 0
    %145 = vmatpush1.bf16.msra.mxu0 %v132
    %146 = vmatprep.subr.bf16.mxu0 0
    %147 = vmatpush1.bf16.msra.mxu0 %v131
    %148 = vmatprep.subr.bf16.mxu0 0
    %149 = vmatpush1.bf16.msra.mxu0 %v130
    %150 = vmatprep.subr.bf16.mxu0 0
    %151 = vmatpush1.bf16.msra.mxu0 %v129
    %152 = vmatprep.subr.bf16.mxu0 0
    %153 = vmatpush1.bf16.msra.mxu0 %v128
    %154 = vmatprep.subr.bf16.mxu0 0
    %155 = vmatpush1.bf16.msra.mxu0 %v127
    %156 = vmatprep.subr.bf16.mxu0 0
    %157 = vmatpush1.bf16.msra.mxu0 %v126
    %158 = vmatprep.subr.bf16.mxu0 0
    %159 = vmatpush2.bf16.msra.mxu0 0
    %160 = vmatprep.subr.bf16.mxu0 0
    %161 = vmatpush2.bf16.msra.mxu0 0
    %162 = vmatprep.subr.bf16.mxu0 0
    %163 = vmatpush2.bf16.msra.mxu0 0
    %164 = vmatprep.subr.bf16.mxu0 0
    %165 = vmatpush2.bf16.msra.mxu0 0
    %166 = vmatprep.subr.bf16.mxu0 0
    %167 = vmatpush2.bf16.msra.mxu0 0
    %168 = vmatprep.subr.bf16.mxu0 0
    %169 = vmatpush2.bf16.msra.mxu0 0
    %170 = vmatprep.subr.bf16.mxu0 0
    %171 = vmatpush2.bf16.msra.mxu0 0
    %172 = vmatprep.subr.bf16.mxu0 0
    %173 = vmatpush2.bf16.msra.mxu0 0
    %174 = vmatprep.mubr.bf16.mxu0 0
    %175 = vmatmul.mubr.bf16.gmra.mxu0 %v90
    %v176 = vpop.f32.mrf.mxu0
    %v177 = vadd.f32 0.0, %v176
    %v178 = vpop.f32.mrf.mxu0
    %v179 = vpop.f32.mrf.mxu0
    %v180 = vadd.f32 0.0, %v179
    %v181 = vpop.f32.mrf.mxu0
    %182 = vmatprep.mubr.bf16.mxu0 0
    %183 = vmatmul.mubr.bf16.gmra.mxu0 %v91
    %v184 = vpop.f32.mrf.mxu0
    %v185 = vadd.f32 0.0, %v184
    %v186 = vpop.f32.mrf.mxu0
    %v187 = vpop.f32.mrf.mxu0
    %v188 = vadd.f32 0.0, %v187
    %v189 = vpop.f32.mrf.mxu0
    %190 = vdwg.mxu0
    %v191 = vpack.c.bf16 %v180, %v177
    %v192 = vpack.c.bf16 %v188, %v185
    %v193 = vld [vmem:[#allocation2] sm:$0xff]
    %v194 = vld [vmem:[#allocation2 + $0x8] sm:$0xff]
    %v195 = vld [vmem:[#allocation2 + $0x10] sm:$0xff]
    %v196 = vld [vmem:[#allocation2 + $0x18] sm:$0xff]
    %v197 = vld [vmem:[#allocation2 + $0x20] sm:$0xff]
    %v198 = vld [vmem:[#allocation2 + $0x28] sm:$0xff]
    %v199 = vld [vmem:[#allocation2 + $0x30] sm:$0xff]
    %v200 = vld [vmem:[#allocation2 + $0x38] sm:$0xff]
    %v201 = vld [vmem:[#allocation2 + $0x40] sm:$0xff]
    %v202 = vld [vmem:[#allocation2 + $0x48] sm:$0xff]
    %v203 = vld [vmem:[#allocation2 + $0x50] sm:$0xff]
    %v204 = vld [vmem:[#allocation2 + $0x58] sm:$0xff]
    %v205 = vld [vmem:[#allocation2 + $0x60] sm:$0xff]
    %v206 = vld [vmem:[#allocation2 + $0x68] sm:$0xff]
    %v207 = vld [vmem:[#allocation2 + $0x70] sm:$0xff]
    %v208 = vld [vmem:[#allocation2 + $0x78] sm:$0xff]
    %v209 = vld [vmem:[#allocation2 + $0x80] sm:$0xff]
    %v210 = vld [vmem:[#allocation2 + $0x88] sm:$0xff]
    %v211 = vld [vmem:[#allocation2 + $0x90] sm:$0xff]
    %v212 = vld [vmem:[#allocation2 + $0x98] sm:$0xff]
    %v213 = vld [vmem:[#allocation2 + $0xa0] sm:$0xff]
    %v214 = vld [vmem:[#allocation2 + $0xa8] sm:$0xff]
    %v215 = vld [vmem:[#allocation2 + $0xb0] sm:$0xff]
    %v216 = vld [vmem:[#allocation2 + $0xb8] sm:$0xff]
    %v217 = vld [vmem:[#allocation2 + $0xc0] sm:$0xff]
    %v218 = vld [vmem:[#allocation2 + $0xc8] sm:$0xff]
    %v219 = vld [vmem:[#allocation2 + $0xd0] sm:$0xff]
    %v220 = vld [vmem:[#allocation2 + $0xd8] sm:$0xff]
    %v221 = vld [vmem:[#allocation2 + $0xe0] sm:$0xff]
    %v222 = vld [vmem:[#allocation2 + $0xe8] sm:$0xff]
    %v223 = vld [vmem:[#allocation2 + $0xf0] sm:$0xff]
    %v224 = vld [vmem:[#allocation2 + $0xf8] sm:$0xff]
    %v225 = vld [vmem:[#allocation2 + $0x100] sm:$0xff]
    %v226 = vld [vmem:[#allocation2 + $0x108] sm:$0xff]
    %v227 = vld [vmem:[#allocation2 + $0x110] sm:$0xff]
    %v228 = vld [vmem:[#allocation2 + $0x118] sm:$0xff]
    %v229 = vld [vmem:[#allocation2 + $0x120] sm:$0xff]
    %v230 = vld [vmem:[#allocation2 + $0x128] sm:$0xff]
    %v231 = vld [vmem:[#allocation2 + $0x130] sm:$0xff]
    %v232 = vld [vmem:[#allocation2 + $0x138] sm:$0xff]
    %v233 = vld [vmem:[#allocation2 + $0x140] sm:$0xff]
    %v234 = vld [vmem:[#allocation2 + $0x148] sm:$0xff]
    %v235 = vld [vmem:[#allocation2 + $0x150] sm:$0xff]
    %v236 = vld [vmem:[#allocation2 + $0x158] sm:$0xff]
    %v237 = vld [vmem:[#allocation2 + $0x160] sm:$0xff]
    %v238 = vld [vmem:[#allocation2 + $0x168] sm:$0xff]
    %v239 = vld [vmem:[#allocation2 + $0x170] sm:$0xff]
    %v240 = vld [vmem:[#allocation2 + $0x178] sm:$0xff]
    %v241 = vld [vmem:[%s5] sm:$0x3f]
    %v243 = vlaneseq
    %v244 = vshrl.u32 %v243, 7
    %v245 = vsub.s32 0, %v244
    %v246 = vrot.slane %v241, %v245
    %v247 = vlaneseq
    %v248 = vshrl.u32 %v247, 7
    %v249 = vsub.s32 1, %v248
    %v250 = vrot.slane %v241, %v249
    %v251 = vlaneseq
    %v252 = vshrl.u32 %v251, 7
    %v253 = vsub.s32 2, %v252
    %v254 = vrot.slane %v241, %v253
    %v255 = vlaneseq
    %v256 = vshrl.u32 %v255, 7
    %v257 = vsub.s32 3, %v256
    %v258 = vrot.slane %v241, %v257
    %v259 = vlaneseq
    %v260 = vshrl.u32 %v259, 7
    %v261 = vsub.s32 4, %v260
    %v262 = vrot.slane %v241, %v261
    %v263 = vlaneseq
    %v264 = vshrl.u32 %v263, 7
    %v265 = vsub.s32 5, %v264
    %v266 = vrot.slane %v241, %v265
    %v321 = vunpack.c.l.b16 %v193
    %v322 = vunpack.c.h.b16 %v193
    %v323 = vunpack.c.l.b16 %v194
    %v324 = vunpack.c.h.b16 %v194
    %v325 = vunpack.c.l.b16 %v195
    %v326 = vunpack.c.h.b16 %v195
    %v327 = vunpack.c.l.b16 %v196
    %v328 = vunpack.c.h.b16 %v196
    %v329 = vunpack.c.l.b16 %v197
    %v330 = vunpack.c.h.b16 %v197
    %v331 = vunpack.c.l.b16 %v198
    %v332 = vunpack.c.h.b16 %v198
    %v333 = vunpack.c.l.b16 %v199
    %v334 = vunpack.c.h.b16 %v199
    %v335 = vunpack.c.l.b16 %v200
    %v336 = vunpack.c.h.b16 %v200
    %v337 = vunpack.c.l.b16 %v201
    %v338 = vunpack.c.h.b16 %v201
    %v339 = vunpack.c.l.b16 %v202
    %v340 = vunpack.c.h.b16 %v202
    %v341 = vunpack.c.l.b16 %v203
    %v342 = vunpack.c.h.b16 %v203
    %v343 = vunpack.c.l.b16 %v204
    %v344 = vunpack.c.h.b16 %v204
    %v345 = vunpack.c.l.b16 %v205
    %v346 = vunpack.c.h.b16 %v205
    %v347 = vunpack.c.l.b16 %v206
    %v348 = vunpack.c.h.b16 %v206
    %v349 = vunpack.c.l.b16 %v207
    %v350 = vunpack.c.h.b16 %v207
    %v351 = vunpack.c.l.b16 %v208
    %v352 = vunpack.c.h.b16 %v208
    %v353 = vunpack.c.l.b16 %v209
    %v354 = vunpack.c.h.b16 %v209
    %v355 = vunpack.c.l.b16 %v210
    %v356 = vunpack.c.h.b16 %v210
    %v357 = vunpack.c.l.b16 %v211
    %v358 = vunpack.c.h.b16 %v211
    %v359 = vunpack.c.l.b16 %v212
    %v360 = vunpack.c.h.b16 %v212
    %v361 = vunpack.c.l.b16 %v213
    %v362 = vunpack.c.h.b16 %v213
    %v363 = vunpack.c.l.b16 %v214
    %v364 = vunpack.c.h.b16 %v214
    %v365 = vunpack.c.l.b16 %v215
    %v366 = vunpack.c.h.b16 %v215
    %v367 = vunpack.c.l.b16 %v216
    %v368 = vunpack.c.h.b16 %v216
    %v369 = vunpack.c.l.b16 %v217
    %v370 = vunpack.c.h.b16 %v217
    %v371 = vunpack.c.l.b16 %v218
    %v372 = vunpack.c.h.b16 %v218
    %v373 = vunpack.c.l.b16 %v219
    %v374 = vunpack.c.h.b16 %v219
    %v375 = vunpack.c.l.b16 %v220
    %v376 = vunpack.c.h.b16 %v220
    %v377 = vunpack.c.l.b16 %v221
    %v378 = vunpack.c.h.b16 %v221
    %v379 = vunpack.c.l.b16 %v222
    %v380 = vunpack.c.h.b16 %v222
    %v381 = vunpack.c.l.b16 %v223
    %v382 = vunpack.c.h.b16 %v223
    %v383 = vunpack.c.l.b16 %v224
    %v384 = vunpack.c.h.b16 %v224
    %v385 = vunpack.c.l.b16 %v225
    %v386 = vunpack.c.h.b16 %v225
    %v387 = vunpack.c.l.b16 %v226
    %v388 = vunpack.c.h.b16 %v226
    %v389 = vunpack.c.l.b16 %v227
    %v390 = vunpack.c.h.b16 %v227
    %v391 = vunpack.c.l.b16 %v228
    %v392 = vunpack.c.h.b16 %v228
    %v393 = vunpack.c.l.b16 %v229
    %v394 = vunpack.c.h.b16 %v229
    %v395 = vunpack.c.l.b16 %v230
    %v396 = vunpack.c.h.b16 %v230
    %v397 = vunpack.c.l.b16 %v231
    %v398 = vunpack.c.h.b16 %v231
    %v399 = vunpack.c.l.b16 %v232
    %v400 = vunpack.c.h.b16 %v232
    %v401 = vunpack.c.l.b16 %v233
    %v402 = vunpack.c.h.b16 %v233
    %v403 = vunpack.c.l.b16 %v234
    %v404 = vunpack.c.h.b16 %v234
    %v405 = vunpack.c.l.b16 %v235
    %v406 = vunpack.c.h.b16 %v235
    %v407 = vunpack.c.l.b16 %v236
    %v408 = vunpack.c.h.b16 %v236
    %v409 = vunpack.c.l.b16 %v237
    %v410 = vunpack.c.h.b16 %v237
    %v411 = vunpack.c.l.b16 %v238
    %v412 = vunpack.c.h.b16 %v238
    %v413 = vunpack.c.l.b16 %v239
    %v414 = vunpack.c.h.b16 %v239
    %v415 = vunpack.c.l.b16 %v240
    %v416 = vunpack.c.h.b16 %v240
    %v417 = vpack.c.b16 %v327, %v321
    %v418 = vpack.c.b16 %v328, %v322
    %v419 = vpack.c.b16 %v329, %v323
    %v420 = vpack.c.b16 %v330, %v324
    %v421 = vpack.c.b16 %v331, %v325
    %v422 = vpack.c.b16 %v332, %v326
    %v423 = vpack.c.b16 %v339, %v333
    %v424 = vpack.c.b16 %v340, %v334
    %v425 = vpack.c.b16 %v341, %v335
    %v426 = vpack.c.b16 %v342, %v336
    %v427 = vpack.c.b16 %v343, %v337
    %v428 = vpack.c.b16 %v344, %v338
    %v429 = vpack.c.b16 %v351, %v345
    %v430 = vpack.c.b16 %v352, %v346
    %v431 = vpack.c.b16 %v353, %v347
    %v432 = vpack.c.b16 %v354, %v348
    %v433 = vpack.c.b16 %v355, %v349
    %v434 = vpack.c.b16 %v356, %v350
    %v435 = vpack.c.b16 %v363, %v357
    %v436 = vpack.c.b16 %v364, %v358
    %v437 = vpack.c.b16 %v365, %v359
    %v438 = vpack.c.b16 %v366, %v360
    %v439 = vpack.c.b16 %v367, %v361
    %v440 = vpack.c.b16 %v368, %v362
    %v441 = vpack.c.b16 %v375, %v369
    %v442 = vpack.c.b16 %v376, %v370
    %v443 = vpack.c.b16 %v377, %v371
    %v444 = vpack.c.b16 %v378, %v372
    %v445 = vpack.c.b16 %v379, %v373
    %v446 = vpack.c.b16 %v380, %v374
    %v447 = vpack.c.b16 %v387, %v381
    %v448 = vpack.c.b16 %v388, %v382
    %v449 = vpack.c.b16 %v389, %v383
    %v450 = vpack.c.b16 %v390, %v384
    %v451 = vpack.c.b16 %v391, %v385
    %v452 = vpack.c.b16 %v392, %v386
    %v453 = vpack.c.b16 %v399, %v393
    %v454 = vpack.c.b16 %v400, %v394
    %v455 = vpack.c.b16 %v401, %v395
    %v456 = vpack.c.b16 %v402, %v396
    %v457 = vpack.c.b16 %v403, %v397
    %v458 = vpack.c.b16 %v404, %v398
    %v459 = vpack.c.b16 %v411, %v405
    %v460 = vpack.c.b16 %v412, %v406
    %v461 = vpack.c.b16 %v413, %v407
    %v462 = vpack.c.b16 %v414, %v408
    %v463 = vpack.c.b16 %v415, %v409
    %v464 = vpack.c.b16 %v416, %v410
    %513 = vmatprep.subr.bf16.mxu0 %v460
    %514 = vmatpush1.bf16.msra.mxu0 %v459
    %515 = vmatprep.subr.bf16.mxu0 %v454
    %516 = vmatpush1.bf16.msra.mxu0 %v453
    %517 = vmatprep.subr.bf16.mxu0 %v448
    %518 = vmatpush1.bf16.msra.mxu0 %v447
    %519 = vmatprep.subr.bf16.mxu0 %v442
    %520 = vmatpush1.bf16.msra.mxu0 %v441
    %521 = vmatprep.subr.bf16.mxu0 %v436
    %522 = vmatpush1.bf16.msra.mxu0 %v435
    %523 = vmatprep.subr.bf16.mxu0 %v430
    %524 = vmatpush1.bf16.msra.mxu0 %v429
    %525 = vmatprep.subr.bf16.mxu0 %v424
    %526 = vmatpush1.bf16.msra.mxu0 %v423
    %527 = vmatprep.subr.bf16.mxu0 %v418
    %528 = vmatpush1.bf16.msra.mxu0 %v417
    %529 = vmatprep.subr.bf16.mxu0 0
    %530 = vmatpush2.bf16.msra.mxu0 0
    %531 = vmatprep.subr.bf16.mxu0 0
    %532 = vmatpush2.bf16.msra.mxu0 0
    %533 = vmatprep.subr.bf16.mxu0 0
    %534 = vmatpush2.bf16.msra.mxu0 0
    %535 = vmatprep.subr.bf16.mxu0 0
    %536 = vmatpush2.bf16.msra.mxu0 0
    %537 = vmatprep.subr.bf16.mxu0 0
    %538 = vmatpush2.bf16.msra.mxu0 0
    %539 = vmatprep.subr.bf16.mxu0 0
    %540 = vmatpush2.bf16.msra.mxu0 0
    %541 = vmatprep.subr.bf16.mxu0 0
    %542 = vmatpush2.bf16.msra.mxu0 0
    %543 = vmatprep.subr.bf16.mxu0 0
    %544 = vmatpush2.bf16.msra.mxu0 0
    %545 = vmatprep.mubr.bf16.mxu0 0
    %546 = vmatmul.mubr.bf16.gmra.mxu0 %v191
    %v547 = vpop.f32.mrf.mxu0
    %v548 = vadd.f32 %v246, %v547
    %v549 = vpop.f32.mrf.mxu0
    %v550 = vadd.f32 %v250, %v549
    %v551 = vpop.f32.mrf.mxu0
    %v552 = vadd.f32 %v246, %v551
    %v553 = vpop.f32.mrf.mxu0
    %v554 = vadd.f32 %v250, %v553
    %555 = vmatprep.mubr.bf16.mxu0 0
    %556 = vmatmul.mubr.bf16.gmra.mxu0 %v192
    %v557 = vpop.f32.mrf.mxu0
    %v558 = vadd.f32 %v246, %v557
    %v559 = vpop.f32.mrf.mxu0
    %v560 = vadd.f32 %v250, %v559
    %v561 = vpop.f32.mrf.mxu0
    %v562 = vadd.f32 %v246, %v561
    %v563 = vpop.f32.mrf.mxu0
    %v564 = vadd.f32 %v250, %v563
    %565 = vdwg.mxu0
    %566 = vmatprep.subr.bf16.mxu0 %v462
    %567 = vmatpush1.bf16.msra.mxu0 %v461
    %568 = vmatprep.subr.bf16.mxu0 %v456
    %569 = vmatpush1.bf16.msra.mxu0 %v455
    %570 = vmatprep.subr.bf16.mxu0 %v450
    %571 = vmatpush1.bf16.msra.mxu0 %v449
    %572 = vmatprep.subr.bf16.mxu0 %v444
    %573 = vmatpush1.bf16.msra.mxu0 %v443
    %574 = vmatprep.subr.bf16.mxu0 %v438
    %575 = vmatpush1.bf16.msra.mxu0 %v437
    %576 = vmatprep.subr.bf16.mxu0 %v432
    %577 = vmatpush1.bf16.msra.mxu0 %v431
    %578 = vmatprep.subr.bf16.mxu0 %v426
    %579 = vmatpush1.bf16.msra.mxu0 %v425
    %580 = vmatprep.subr.bf16.mxu0 %v420
    %581 = vmatpush1.bf16.msra.mxu0 %v419
    %582 = vmatprep.subr.bf16.mxu0 0
    %583 = vmatpush2.bf16.msra.mxu0 0
    %584 = vmatprep.subr.bf16.mxu0 0
    %585 = vmatpush2.bf16.msra.mxu0 0
    %586 = vmatprep.subr.bf16.mxu0 0
    %587 = vmatpush2.bf16.msra.mxu0 0
    %588 = vmatprep.subr.bf16.mxu0 0
    %589 = vmatpush2.bf16.msra.mxu0 0
    %590 = vmatprep.subr.bf16.mxu0 0
    %591 = vmatpush2.bf16.msra.mxu0 0
    %592 = vmatprep.subr.bf16.mxu0 0
    %593 = vmatpush2.bf16.msra.mxu0 0
    %594 = vmatprep.subr.bf16.mxu0 0
    %595 = vmatpush2.bf16.msra.mxu0 0
    %596 = vmatprep.subr.bf16.mxu0 0
    %597 = vmatpush2.bf16.msra.mxu0 0
    %598 = vmatprep.mubr.bf16.mxu0 0
    %599 = vmatmul.mubr.bf16.gmra.mxu0 %v191
    %v600 = vpop.f32.mrf.mxu0
    %v601 = vadd.f32 %v254, %v600
    %v602 = vpop.f32.mrf.mxu0
    %v603 = vadd.f32 %v258, %v602
    %v604 = vpop.f32.mrf.mxu0
    %v605 = vadd.f32 %v254, %v604
    %v606 = vpop.f32.mrf.mxu0
    %v607 = vadd.f32 %v258, %v606
    %608 = vmatprep.mubr.bf16.mxu0 0
    %609 = vmatmul.mubr.bf16.gmra.mxu0 %v192
    %v610 = vpop.f32.mrf.mxu0
    %v611 = vadd.f32 %v254, %v610
    %v612 = vpop.f32.mrf.mxu0
    %v613 = vadd.f32 %v258, %v612
    %v614 = vpop.f32.mrf.mxu0
    %v615 = vadd.f32 %v254, %v614
    %v616 = vpop.f32.mrf.mxu0
    %v617 = vadd.f32 %v258, %v616
    %618 = vdwg.mxu0
    %619 = vmatprep.subr.bf16.mxu0 %v464
    %620 = vmatpush1.bf16.msra.mxu0 %v463
    %621 = vmatprep.subr.bf16.mxu0 %v458
    %622 = vmatpush1.bf16.msra.mxu0 %v457
    %623 = vmatprep.subr.bf16.mxu0 %v452
    %624 = vmatpush1.bf16.msra.mxu0 %v451
    %625 = vmatprep.subr.bf16.mxu0 %v446
    %626 = vmatpush1.bf16.msra.mxu0 %v445
    %627 = vmatprep.subr.bf16.mxu0 %v440
    %628 = vmatpush1.bf16.msra.mxu0 %v439
    %629 = vmatprep.subr.bf16.mxu0 %v434
    %630 = vmatpush1.bf16.msra.mxu0 %v433
    %631 = vmatprep.subr.bf16.mxu0 %v428
    %632 = vmatpush1.bf16.msra.mxu0 %v427
    %633 = vmatprep.subr.bf16.mxu0 %v422
    %634 = vmatpush1.bf16.msra.mxu0 %v421
    %635 = vmatprep.subr.bf16.mxu0 0
    %636 = vmatpush2.bf16.msra.mxu0 0
    %637 = vmatprep.subr.bf16.mxu0 0
    %638 = vmatpush2.bf16.msra.mxu0 0
    %639 = vmatprep.subr.bf16.mxu0 0
    %640 = vmatpush2.bf16.msra.mxu0 0
    %641 = vmatprep.subr.bf16.mxu0 0
    %642 = vmatpush2.bf16.msra.mxu0 0
    %643 = vmatprep.subr.bf16.mxu0 0
    %644 = vmatpush2.bf16.msra.mxu0 0
    %645 = vmatprep.subr.bf16.mxu0 0
    %646 = vmatpush2.bf16.msra.mxu0 0
    %647 = vmatprep.subr.bf16.mxu0 0
    %648 = vmatpush2.bf16.msra.mxu0 0
    %649 = vmatprep.subr.bf16.mxu0 0
    %650 = vmatpush2.bf16.msra.mxu0 0
    %651 = vmatprep.mubr.bf16.mxu0 0
    %652 = vmatmul.mubr.bf16.gmra.mxu0 %v191
    %v653 = vpop.f32.mrf.mxu0
    %v654 = vadd.f32 %v262, %v653
    %v655 = vpop.f32.mrf.mxu0
    %v656 = vadd.f32 %v266, %v655
    %v657 = vpop.f32.mrf.mxu0
    %v658 = vadd.f32 %v262, %v657
    %v659 = vpop.f32.mrf.mxu0
    %v660 = vadd.f32 %v266, %v659
    %661 = vmatprep.mubr.bf16.mxu0 0
    %662 = vmatmul.mubr.bf16.gmra.mxu0 %v192
    %v663 = vpop.f32.mrf.mxu0
    %v664 = vadd.f32 %v262, %v663
    %v665 = vpop.f32.mrf.mxu0
    %v666 = vadd.f32 %v266, %v665
    %v667 = vpop.f32.mrf.mxu0
    %v668 = vadd.f32 %v262, %v667
    %v669 = vpop.f32.mrf.mxu0
    %v670 = vadd.f32 %v266, %v669
    %671 = vdwg.mxu0
    %v672 = vmax.f32 %v177, %v180
    %v673 = vrot.slane %v672, 4
    %v674 = vmax.f32 %v672, %v673
    %v675 = vrot.slane %v674, 2
    %v676 = vmax.f32 %v674, %v675
    %v677 = vrot.slane %v676, 1
    %v678 = vmax.f32 %v676, %v677
    %v679 = vmax.f32 %v185, %v188
    %v680 = vrot.slane %v679, 4
    %v681 = vmax.f32 %v679, %v680
    %v682 = vrot.slane %v681, 2
    %v683 = vmax.f32 %v681, %v682
    %v684 = vrot.slane %v683, 1
    %v685 = vmax.f32 %v683, %v684
    %v686 = vpack.c.bf16 %v678, %v678
    %v687 = vpack.c.bf16 %v685, %v685
    %v688 = vld [vmem:[%s2] sm:$0xff]
    %v689 = vld [vmem:[%s2 + $0x8] sm:$0xf]
    %v690 = vld [vmem:[%s2 + $0xc] sm:$0xff]
    %v691 = vld [vmem:[%s2 + $0x14] sm:$0xf]
    %v692 = vld [vmem:[%s2 + $0x18] sm:$0xff]
    %v693 = vld [vmem:[%s2 + $0x20] sm:$0xf]
    %v694 = vld [vmem:[%s2 + $0x24] sm:$0xff]
    %v695 = vld [vmem:[%s2 + $0x2c] sm:$0xf]
    %v696 = vld [vmem:[%s2 + $0x30] sm:$0xff]
    %v697 = vld [vmem:[%s2 + $0x38] sm:$0xf]
    %v698 = vld [vmem:[%s2 + $0x3c] sm:$0xff]
    %v699 = vld [vmem:[%s2 + $0x44] sm:$0xf]
    %v700 = vld [vmem:[%s2 + $0x48] sm:$0xff]
    %v701 = vld [vmem:[%s2 + $0x50] sm:$0xf]
    %v702 = vld [vmem:[%s2 + $0x54] sm:$0xff]
    %v703 = vld [vmem:[%s2 + $0x5c] sm:$0xf]
    %v704 = vld [vmem:[%s2 + $0x60] sm:$0xff]
    %v705 = vld [vmem:[%s2 + $0x68] sm:$0xf]
    %v706 = vld [vmem:[%s2 + $0x6c] sm:$0xff]
    %v707 = vld [vmem:[%s2 + $0x74] sm:$0xf]
    %v708 = vld [vmem:[%s2 + $0x78] sm:$0xff]
    %v709 = vld [vmem:[%s2 + $0x80] sm:$0xf]
    %v710 = vld [vmem:[%s2 + $0x84] sm:$0xff]
    %v711 = vld [vmem:[%s2 + $0x8c] sm:$0xf]
    %v712 = vld [vmem:[%s2 + $0x90] sm:$0xff]
    %v713 = vld [vmem:[%s2 + $0x98] sm:$0xf]
    %v714 = vld [vmem:[%s2 + $0x9c] sm:$0xff]
    %v715 = vld [vmem:[%s2 + $0xa4] sm:$0xf]
    %v716 = vld [vmem:[%s2 + $0xa8] sm:$0xff]
    %v717 = vld [vmem:[%s2 + $0xb0] sm:$0xf]
    %v718 = vld [vmem:[%s2 + $0xb4] sm:$0xff]
    %v719 = vld [vmem:[%s2 + $0xbc] sm:$0xf]
    %v720 = vld [vmem:[%s3] sm:$0x7]
    %v722 = vlaneseq
    %v723 = vshrl.u32 %v722, 7
    %v724 = vsub.s32 0, %v723
    %v725 = vrot.slane %v720, %v724
    %v726 = vlaneseq
    %v727 = vshrl.u32 %v726, 7
    %v728 = vsub.s32 1, %v727
    %v729 = vrot.slane %v720, %v728
    %v730 = vlaneseq
    %v731 = vshrl.u32 %v730, 7
    %v732 = vsub.s32 2, %v731
    %v733 = vrot.slane %v720, %v732
    %v739 = vunpack.c.l.b16 %v686
    %v740 = vunpack.c.l.b16 %v687
    %vm741 = vcmask 1041409
    %v742 = vsel %vm741, %v740, %v739
    %v743 = vpack.c.b16 %v742, %v742
    %v777 = vunpack.c.l.b16 %v688
    %v778 = vunpack.c.h.b16 %v688
    %v779 = vunpack.c.l.b16 %v689
    %v780 = vunpack.c.l.b16 %v690
    %v781 = vunpack.c.h.b16 %v690
    %v782 = vunpack.c.l.b16 %v691
    %v783 = vunpack.c.l.b16 %v692
    %v784 = vunpack.c.h.b16 %v692
    %v785 = vunpack.c.l.b16 %v693
    %v786 = vunpack.c.l.b16 %v694
    %v787 = vunpack.c.h.b16 %v694
    %v788 = vunpack.c.l.b16 %v695
    %v789 = vunpack.c.l.b16 %v696
    %v790 = vunpack.c.h.b16 %v696
    %v791 = vunpack.c.l.b16 %v697
    %v792 = vunpack.c.l.b16 %v698
    %v793 = vunpack.c.h.b16 %v698
    %v794 = vunpack.c.l.b16 %v699
    %v795 = vunpack.c.l.b16 %v700
    %v796 = vunpack.c.h.b16 %v700
    %v797 = vunpack.c.l.b16 %v701
    %v798 = vunpack.c.l.b16 %v702
    %v799 = vunpack.c.h.b16 %v702
    %v800 = vunpack.c.l.b16 %v703
    %v801 = vunpack.c.l.b16 %v704
    %v802 = vunpack.c.h.b16 %v704
    %v803 = vunpack.c.l.b16 %v705
    %v804 = vunpack.c.l.b16 %v706
    %v805 = vunpack.c.h.b16 %v706
    %v806 = vunpack.c.l.b16 %v707
    %v807 = vunpack.c.l.b16 %v708
    %v808 = vunpack.c.h.b16 %v708
    %v809 = vunpack.c.l.b16 %v709
    %v810 = vunpack.c.l.b16 %v710
    %v811 = vunpack.c.h.b16 %v710
    %v812 = vunpack.c.l.b16 %v711
    %v813 = vunpack.c.l.b16 %v712
    %v814 = vunpack.c.h.b16 %v712
    %v815 = vunpack.c.l.b16 %v713
    %v816 = vunpack.c.l.b16 %v714
    %v817 = vunpack.c.h.b16 %v714
    %v818 = vunpack.c.l.b16 %v715
    %v819 = vunpack.c.l.b16 %v716
    %v820 = vunpack.c.h.b16 %v716
    %v821 = vunpack.c.l.b16 %v717
    %v822 = vunpack.c.l.b16 %v718
    %v823 = vunpack.c.h.b16 %v718
    %v824 = vunpack.c.l.b16 %v719
    %v825 = vpack.c.b16 %v780, %v777
    %v826 = vpack.c.b16 %v781, %v778
    %v827 = vpack.c.b16 %v782, %v779
    %v828 = vpack.c.b16 %v786, %v783
    %v829 = vpack.c.b16 %v787, %v784
    %v830 = vpack.c.b16 %v788, %v785
    %v831 = vpack.c.b16 %v792, %v789
    %v832 = vpack.c.b16 %v793, %v790
    %v833 = vpack.c.b16 %v794, %v791
    %v834 = vpack.c.b16 %v798, %v795
    %v835 = vpack.c.b16 %v799, %v796
    %v836 = vpack.c.b16 %v800, %v797
    %v837 = vpack.c.b16 %v804, %v801
    %v838 = vpack.c.b16 %v805, %v802
    %v839 = vpack.c.b16 %v806, %v803
    %v840 = vpack.c.b16 %v810, %v807
    %v841 = vpack.c.b16 %v811, %v808
    %v842 = vpack.c.b16 %v812, %v809
    %v843 = vpack.c.b16 %v816, %v813
    %v844 = vpack.c.b16 %v817, %v814
    %v845 = vpack.c.b16 %v818, %v815
    %v846 = vpack.c.b16 %v822, %v819
    %v847 = vpack.c.b16 %v823, %v820
    %v848 = vpack.c.b16 %v824, %v821
    %873 = vmatprep.subr.bf16.mxu0 %v847
    %874 = vmatpush1.bf16.msra.mxu0 %v846
    %875 = vmatprep.subr.bf16.mxu0 %v844
    %876 = vmatpush1.bf16.msra.mxu0 %v843
    %877 = vmatprep.subr.bf16.mxu0 %v841
    %878 = vmatpush1.bf16.msra.mxu0 %v840
    %879 = vmatprep.subr.bf16.mxu0 %v838
    %880 = vmatpush1.bf16.msra.mxu0 %v837
    %881 = vmatprep.subr.bf16.mxu0 %v835
    %882 = vmatpush1.bf16.msra.mxu0 %v834
    %883 = vmatprep.subr.bf16.mxu0 %v832
    %884 = vmatpush1.bf16.msra.mxu0 %v831
    %885 = vmatprep.subr.bf16.mxu0 %v829
    %886 = vmatpush1.bf16.msra.mxu0 %v828
    %887 = vmatprep.subr.bf16.mxu0 %v826
    %888 = vmatpush1.bf16.msra.mxu0 %v825
    %889 = vmatprep.subr.bf16.mxu0 0
    %890 = vmatpush2.bf16.msra.mxu0 0
    %891 = vmatprep.subr.bf16.mxu0 0
    %892 = vmatpush2.bf16.msra.mxu0 0
    %893 = vmatprep.subr.bf16.mxu0 0
    %894 = vmatpush2.bf16.msra.mxu0 0
    %895 = vmatprep.subr.bf16.mxu0 0
    %896 = vmatpush2.bf16.msra.mxu0 0
    %897 = vmatprep.subr.bf16.mxu0 0
    %898 = vmatpush2.bf16.msra.mxu0 0
    %899 = vmatprep.subr.bf16.mxu0 0
    %900 = vmatpush2.bf16.msra.mxu0 0
    %901 = vmatprep.subr.bf16.mxu0 0
    %902 = vmatpush2.bf16.msra.mxu0 0
    %903 = vmatprep.subr.bf16.mxu0 0
    %904 = vmatpush2.bf16.msra.mxu0 0
    %905 = vmatprep.mubr.bf16.mxu0 0
    %906 = vmatmul.mubr.bf16.gmra.mxu0 %v743
    %v907 = vpop.f32.mrf.mxu0
    %v908 = vadd.f32 %v725, %v907
    %v909 = vpop.f32.mrf.mxu0
    %v910 = vadd.f32 %v729, %v909
    %v911 = vpop.f32.mrf.mxu0
    %v912 = vpop.f32.mrf.mxu0
    %913 = vdwg.mxu0
    %914 = vmatprep.subr.bf16.mxu0 0
    %915 = vmatpush1.bf16.msra.mxu0 %v848
    %916 = vmatprep.subr.bf16.mxu0 0
    %917 = vmatpush1.bf16.msra.mxu0 %v845
    %918 = vmatprep.subr.bf16.mxu0 0
    %919 = vmatpush1.bf16.msra.mxu0 %v842
    %920 = vmatprep.subr.bf16.mxu0 0
    %921 = vmatpush1.bf16.msra.mxu0 %v839
    %922 = vmatprep.subr.bf16.mxu0 0
    %923 = vmatpush1.bf16.msra.mxu0 %v836
    %924 = vmatprep.subr.bf16.mxu0 0
    %925 = vmatpush1.bf16.msra.mxu0 %v833
    %926 = vmatprep.subr.bf16.mxu0 0
    %927 = vmatpush1.bf16.msra.mxu0 %v830
    %928 = vmatprep.subr.bf16.mxu0 0
    %929 = vmatpush1.bf16.msra.mxu0 %v827
    %930 = vmatprep.subr.bf16.mxu0 0
    %931 = vmatpush2.bf16.msra.mxu0 0
    %932 = vmatprep.subr.bf16.mxu0 0
    %933 = vmatpush2.bf16.msra.mxu0 0
    %934 = vmatprep.subr.bf16.mxu0 0
    %935 = vmatpush2.bf16.msra.mxu0 0
    %936 = vmatprep.subr.bf16.mxu0 0
    %937 = vmatpush2.bf16.msra.mxu0 0
    %938 = vmatprep.subr.bf16.mxu0 0
    %939 = vmatpush2.bf16.msra.mxu0 0
    %940 = vmatprep.subr.bf16.mxu0 0
    %941 = vmatpush2.bf16.msra.mxu0 0
    %942 = vmatprep.subr.bf16.mxu0 0
    %943 = vmatpush2.bf16.msra.mxu0 0
    %944 = vmatprep.subr.bf16.mxu0 0
    %945 = vmatpush2.bf16.msra.mxu0 0
    %946 = vmatprep.mubr.bf16.mxu0 0
    %947 = vmatmul.mubr.bf16.gmra.mxu0 %v743
    %v948 = vpop.f32.mrf.mxu0
    %v949 = vadd.f32 %v733, %v948
    %v950 = vpop.f32.mrf.mxu0
    %v951 = vpop.f32.mrf.mxu0
    %v952 = vpop.f32.mrf.mxu0
    %953 = vdwg.mxu0
    %v957 = vcombine.low %v908, %v910
    %v959 = vunpack.c.l.s4 1966171168
    %v960 = vunpack.c.0.s8 %v959
    %v961 = vlaneseq
    %v962 = vshrl.u32 %v961, 7
    %v963 = vsub.s32 %v960, %v962
    %v964 = vrot.slane %v957, %v963
    %v966 = vunpack.c.l.s4 1966171168
    %v967 = vunpack.c.0.s8 %v966
    %v968 = vlaneseq
    %v969 = vshrl.u32 %v968, 7
    %v970 = vsub.s32 %v967, %v969
    %v971 = vrot.slane %v949, %v970
    %v972 = vcombine.low %v964, %v971
    %v973 = vcombine.high %v964, %v971
    %v975 = vunpack.c.l.s4 1966171168
    %v976 = vunpack.c.0.s8 %v975
    %v977 = vlaneseq
    %v978 = vshrl.u32 %v977, 7
    %v979 = vsub.s32 %v976, %v978
    %v980 = vrot.slane %v972, %v979
    %v982 = vunpack.c.l.s4 1966171168
    %v983 = vunpack.c.0.s8 %v982
    %v984 = vlaneseq
    %v985 = vshrl.u32 %v984, 7
    %v986 = vsub.s32 %v983, %v985
    %v987 = vrot.slane %v973, %v986
    %v988 = vlaneseq
    %v989 = vshrl.u32 %v988, 7
    %v990 = vsub.s32 0, %v989
    %v991 = vrot.slane %v980, %v990
    %v992 = vlaneseq
    %v993 = vshrl.u32 %v992, 7
    %v994 = vsub.s32 1, %v993
    %v995 = vrot.slane %v980, %v994
    %v996 = vlaneseq
    %v997 = vshrl.u32 %v996, 7
    %v998 = vsub.s32 2, %v997
    %v999 = vrot.slane %v980, %v998
    %v1000 = vlaneseq
    %v1001 = vshrl.u32 %v1000, 7
    %v1002 = vsub.s32 0, %v1001
    %v1003 = vrot.slane %v987, %v1002
    %v1004 = vlaneseq
    %v1005 = vshrl.u32 %v1004, 7
    %v1006 = vsub.s32 1, %v1005
    %v1007 = vrot.slane %v987, %v1006
    %v1008 = vlaneseq
    %v1009 = vshrl.u32 %v1008, 7
    %v1010 = vsub.s32 2, %v1009
    %v1011 = vrot.slane %v987, %v1010
    %v1018 = vmul.f32 %v548, %v991
    %v1019 = vmul.f32 %v550, %v995
    %v1020 = vmul.f32 %v601, %v999
    %v1021 = vmul.f32 %v552, %v991
    %v1022 = vmul.f32 %v554, %v995
    %v1023 = vmul.f32 %v605, %v999
    %v1024 = vmul.f32 %v558, %v1003
    %v1025 = vmul.f32 %v560, %v1007
    %v1026 = vmul.f32 %v611, %v1011
    %v1027 = vmul.f32 %v562, %v1003
    %v1028 = vmul.f32 %v564, %v1007
    %v1029 = vmul.f32 %v615, %v1011
    %v1030 = vpack.c.bf16 %v1021, %v1018
    %v1031 = vpack.c.bf16 %v1022, %v1019
    %v1032 = vpack.c.bf16 %v1023, %v1020
    %v1033 = vpack.c.bf16 %v1027, %v1024
    %v1034 = vpack.c.bf16 %v1028, %v1025
    %v1035 = vpack.c.bf16 %v1029, %v1026
    %v1036 = vld [vmem:[%s6] sm:$0xf]
    %v1037 = vld [vmem:[%s6 + $0x4] sm:$0xf]
    %v1038 = vld [vmem:[%s6 + $0x8] sm:$0xf]
    %v1039 = vld [vmem:[%s6 + $0xc] sm:$0xf]
    %v1040 = vld [vmem:[%s6 + $0x10] sm:$0xf]
    %v1041 = vld [vmem:[%s6 + $0x14] sm:$0xf]
    %v1042 = vld [vmem:[%s6 + $0x18] sm:$0xf]
    %v1043 = vld [vmem:[%s6 + $0x1c] sm:$0xf]
    %v1044 = vld [vmem:[%s6 + $0x20] sm:$0xf]
    %v1045 = vld [vmem:[%s6 + $0x24] sm:$0xf]
    %v1046 = vld [vmem:[%s6 + $0x28] sm:$0xf]
    %v1047 = vld [vmem:[%s6 + $0x2c] sm:$0xf]
    %v1048 = vld [vmem:[%s6 + $0x30] sm:$0xf]
    %v1049 = vld [vmem:[%s6 + $0x34] sm:$0xf]
    %v1050 = vld [vmem:[%s6 + $0x38] sm:$0xf]
    %v1051 = vld [vmem:[%s6 + $0x3c] sm:$0xf]
    %v1052 = vld [vmem:[%s6 + $0x40] sm:$0xf]
    %v1053 = vld [vmem:[%s6 + $0x44] sm:$0xf]
    %v1054 = vld [vmem:[%s6 + $0x48] sm:$0xf]
    %v1055 = vld [vmem:[%s6 + $0x4c] sm:$0xf]
    %v1056 = vld [vmem:[%s6 + $0x50] sm:$0xf]
    %v1057 = vld [vmem:[%s6 + $0x54] sm:$0xf]
    %v1058 = vld [vmem:[%s6 + $0x58] sm:$0xf]
    %v1059 = vld [vmem:[%s6 + $0x5c] sm:$0xf]
    %v1060 = vld [vmem:[%s6 + $0x60] sm:$0xf]
    %v1061 = vld [vmem:[%s6 + $0x64] sm:$0xf]
    %v1062 = vld [vmem:[%s6 + $0x68] sm:$0xf]
    %v1063 = vld [vmem:[%s6 + $0x6c] sm:$0xf]
    %v1064 = vld [vmem:[%s6 + $0x70] sm:$0xf]
    %v1065 = vld [vmem:[%s6 + $0x74] sm:$0xf]
    %v1066 = vld [vmem:[%s6 + $0x78] sm:$0xf]
    %v1067 = vld [vmem:[%s6 + $0x7c] sm:$0xf]
    %v1068 = vld [vmem:[%s6 + $0x80] sm:$0xf]
    %v1069 = vld [vmem:[%s6 + $0x84] sm:$0xf]
    %v1070 = vld [vmem:[%s6 + $0x88] sm:$0xf]
    %v1071 = vld [vmem:[%s6 + $0x8c] sm:$0xf]
    %v1072 = vld [vmem:[%s6 + $0x90] sm:$0xf]
    %v1073 = vld [vmem:[%s6 + $0x94] sm:$0xf]
    %v1074 = vld [vmem:[%s6 + $0x98] sm:$0xf]
    %v1075 = vld [vmem:[%s6 + $0x9c] sm:$0xf]
    %v1076 = vld [vmem:[%s6 + $0xa0] sm:$0xf]
    %v1077 = vld [vmem:[%s6 + $0xa4] sm:$0xf]
    %v1078 = vld [vmem:[%s6 + $0xa8] sm:$0xf]
    %v1079 = vld [vmem:[%s6 + $0xac] sm:$0xf]
    %v1080 = vld [vmem:[%s6 + $0xb0] sm:$0xf]
    %v1081 = vld [vmem:[%s6 + $0xb4] sm:$0xf]
    %v1082 = vld [vmem:[%s6 + $0xb8] sm:$0xf]
    %v1083 = vld [vmem:[%s6 + $0xbc] sm:$0xf]
    %v1132 = vunpack.c.l.b16 %v1036
    %v1133 = vunpack.c.l.b16 %v1037
    %v1134 = vunpack.c.l.b16 %v1038
    %v1135 = vunpack.c.l.b16 %v1039
    %v1136 = vunpack.c.l.b16 %v1040
    %v1137 = vunpack.c.l.b16 %v1041
    %v1138 = vunpack.c.l.b16 %v1042
    %v1139 = vunpack.c.l.b16 %v1043
    %v1140 = vunpack.c.l.b16 %v1044
    %v1141 = vunpack.c.l.b16 %v1045
    %v1142 = vunpack.c.l.b16 %v1046
    %v1143 = vunpack.c.l.b16 %v1047
    %v1144 = vunpack.c.l.b16 %v1048
    %v1145 = vunpack.c.l.b16 %v1049
    %v1146 = vunpack.c.l.b16 %v1050
    %v1147 = vunpack.c.l.b16 %v1051
    %v1148 = vunpack.c.l.b16 %v1052
    %v1149 = vunpack.c.l.b16 %v1053
    %v1150 = vunpack.c.l.b16 %v1054
    %v1151 = vunpack.c.l.b16 %v1055
    %v1152 = vunpack.c.l.b16 %v1056
    %v1153 = vunpack.c.l.b16 %v1057
    %v1154 = vunpack.c.l.b16 %v1058
    %v1155 = vunpack.c.l.b16 %v1059
    %v1156 = vunpack.c.l.b16 %v1060
    %v1157 = vunpack.c.l.b16 %v1061
    %v1158 = vunpack.c.l.b16 %v1062
    %v1159 = vunpack.c.l.b16 %v1063
    %v1160 = vunpack.c.l.b16 %v1064
    %v1161 = vunpack.c.l.b16 %v1065
    %v1162 = vunpack.c.l.b16 %v1066
    %v1163 = vunpack.c.l.b16 %v1067
    %v1164 = vunpack.c.l.b16 %v1068
    %v1165 = vunpack.c.l.b16 %v1069
    %v1166 = vunpack.c.l.b16 %v1070
    %v1167 = vunpack.c.l.b16 %v1071
    %v1168 = vunpack.c.l.b16 %v1072
    %v1169 = vunpack.c.l.b16 %v1073
    %v1170 = vunpack.c.l.b16 %v1074
    %v1171 = vunpack.c.l.b16 %v1075
    %v1172 = vunpack.c.l.b16 %v1076
    %v1173 = vunpack.c.l.b16 %v1077
    %v1174 = vunpack.c.l.b16 %v1078
    %v1175 = vunpack.c.l.b16 %v1079
    %v1176 = vunpack.c.l.b16 %v1080
    %v1177 = vunpack.c.l.b16 %v1081
    %v1178 = vunpack.c.l.b16 %v1082
    %v1179 = vunpack.c.l.b16 %v1083
    %v1180 = vpack.c.b16 %v1133, %v1132
    %v1181 = vpack.c.b16 %v1135, %v1134
    %v1182 = vpack.c.b16 %v1137, %v1136
    %v1183 = vpack.c.b16 %v1139, %v1138
    %v1184 = vpack.c.b16 %v1141, %v1140
    %v1185 = vpack.c.b16 %v1143, %v1142
    %v1186 = vpack.c.b16 %v1145, %v1144
    %v1187 = vpack.c.b16 %v1147, %v1146
    %v1188 = vpack.c.b16 %v1149, %v1148
    %v1189 = vpack.c.b16 %v1151, %v1150
    %v1190 = vpack.c.b16 %v1153, %v1152
    %v1191 = vpack.c.b16 %v1155, %v1154
    %v1192 = vpack.c.b16 %v1157, %v1156
    %v1193 = vpack.c.b16 %v1159, %v1158
    %v1194 = vpack.c.b16 %v1161, %v1160
    %v1195 = vpack.c.b16 %v1163, %v1162
    %v1196 = vpack.c.b16 %v1165, %v1164
    %v1197 = vpack.c.b16 %v1167, %v1166
    %v1198 = vpack.c.b16 %v1169, %v1168
    %v1199 = vpack.c.b16 %v1171, %v1170
    %v1200 = vpack.c.b16 %v1173, %v1172
    %v1201 = vpack.c.b16 %v1175, %v1174
    %v1202 = vpack.c.b16 %v1177, %v1176
    %v1203 = vpack.c.b16 %v1179, %v1178
    %1228 = vmatprep.subr.bf16.mxu0 0
    %1229 = vmatpush1.bf16.msra.mxu0 %v1187
    %1230 = vmatprep.subr.bf16.mxu0 0
    %1231 = vmatpush1.bf16.msra.mxu0 %v1186
    %1232 = vmatprep.subr.bf16.mxu0 0
    %1233 = vmatpush1.bf16.msra.mxu0 %v1185
    %1234 = vmatprep.subr.bf16.mxu0 0
    %1235 = vmatpush1.bf16.msra.mxu0 %v1184
    %1236 = vmatprep.subr.bf16.mxu0 0
    %1237 = vmatpush1.bf16.msra.mxu0 %v1183
    %1238 = vmatprep.subr.bf16.mxu0 0
    %1239 = vmatpush1.bf16.msra.mxu0 %v1182
    %1240 = vmatprep.subr.bf16.mxu0 0
    %1241 = vmatpush1.bf16.msra.mxu0 %v1181
    %1242 = vmatprep.subr.bf16.mxu0 0
    %1243 = vmatpush1.bf16.msra.mxu0 %v1180
    %1244 = vmatprep.subr.bf16.mxu0 0
    %1245 = vmatpush2.bf16.msra.mxu0 %v1195
    %1246 = vmatprep.subr.bf16.mxu0 0
    %1247 = vmatpush2.bf16.msra.mxu0 %v1194
    %1248 = vmatprep.subr.bf16.mxu0 0
    %1249 = vmatpush2.bf16.msra.mxu0 %v1193
    %1250 = vmatprep.subr.bf16.mxu0 0
    %1251 = vmatpush2.bf16.msra.mxu0 %v1192
    %1252 = vmatprep.subr.bf16.mxu0 0
    %1253 = vmatpush2.bf16.msra.mxu0 %v1191
    %1254 = vmatprep.subr.bf16.mxu0 0
    %1255 = vmatpush2.bf16.msra.mxu0 %v1190
    %1256 = vmatprep.subr.bf16.mxu0 0
    %1257 = vmatpush2.bf16.msra.mxu0 %v1189
    %1258 = vmatprep.subr.bf16.mxu0 0
    %1259 = vmatpush2.bf16.msra.mxu0 %v1188
    %1260 = vmatprep.mubr.bf16.mxu0 %v1031
    %1261 = vmatmul.mubr.bf16.gmra.mxu0 %v1030
    %v1262 = vpop.f32.mrf.mxu0
    %v1263 = vadd.f32 0.0, %v1262
    %v1264 = vpop.f32.mrf.mxu0
    %v1265 = vpop.f32.mrf.mxu0
    %v1266 = vadd.f32 0.0, %v1265
    %v1267 = vpop.f32.mrf.mxu0
    %1268 = vmatprep.mubr.bf16.mxu0 %v1034
    %1269 = vmatmul.mubr.bf16.gmra.mxu0 %v1033
    %v1270 = vpop.f32.mrf.mxu0
    %v1271 = vadd.f32 0.0, %v1270
    %v1272 = vpop.f32.mrf.mxu0
    %v1273 = vpop.f32.mrf.mxu0
    %v1274 = vadd.f32 0.0, %v1273
    %v1275 = vpop.f32.mrf.mxu0
    %1276 = vdwg.mxu0
    %1277 = vmatprep.subr.bf16.mxu0 0
    %1278 = vmatpush1.bf16.msra.mxu0 %v1203
    %1279 = vmatprep.subr.bf16.mxu0 0
    %1280 = vmatpush1.bf16.msra.mxu0 %v1202
    %1281 = vmatprep.subr.bf16.mxu0 0
    %1282 = vmatpush1.bf16.msra.mxu0 %v1201
    %1283 = vmatprep.subr.bf16.mxu0 0
    %1284 = vmatpush1.bf16.msra.mxu0 %v1200
    %1285 = vmatprep.subr.bf16.mxu0 0
    %1286 = vmatpush1.bf16.msra.mxu0 %v1199
    %1287 = vmatprep.subr.bf16.mxu0 0
    %1288 = vmatpush1.bf16.msra.mxu0 %v1198
    %1289 = vmatprep.subr.bf16.mxu0 0
    %1290 = vmatpush1.bf16.msra.mxu0 %v1197
    %1291 = vmatprep.subr.bf16.mxu0 0
    %1292 = vmatpush1.bf16.msra.mxu0 %v1196
    %1293 = vmatprep.subr.bf16.mxu0 0
    %1294 = vmatpush2.bf16.msra.mxu0 0
    %1295 = vmatprep.subr.bf16.mxu0 0
    %1296 = vmatpush2.bf16.msra.mxu0 0
    %1297 = vmatprep.subr.bf16.mxu0 0
    %1298 = vmatpush2.bf16.msra.mxu0 0
    %1299 = vmatprep.subr.bf16.mxu0 0
    %1300 = vmatpush2.bf16.msra.mxu0 0
    %1301 = vmatprep.subr.bf16.mxu0 0
    %1302 = vmatpush2.bf16.msra.mxu0 0
    %1303 = vmatprep.subr.bf16.mxu0 0
    %1304 = vmatpush2.bf16.msra.mxu0 0
    %1305 = vmatprep.subr.bf16.mxu0 0
    %1306 = vmatpush2.bf16.msra.mxu0 0
    %1307 = vmatprep.subr.bf16.mxu0 0
    %1308 = vmatpush2.bf16.msra.mxu0 0
    %1309 = vmatprep.mubr.bf16.mxu0 0
    %1310 = vmatmul.mubr.bf16.gmra.mxu0 %v1032
    %v1311 = vpop.f32.mrf.mxu0
    %v1312 = vadd.f32 %v1263, %v1311
    %v1313 = vpop.f32.mrf.mxu0
    %v1314 = vpop.f32.mrf.mxu0
    %v1315 = vadd.f32 %v1266, %v1314
    %v1316 = vpop.f32.mrf.mxu0
    %1317 = vmatprep.mubr.bf16.mxu0 0
    %1318 = vmatmul.mubr.bf16.gmra.mxu0 %v1035
    %v1319 = vpop.f32.mrf.mxu0
    %v1320 = vadd.f32 %v1271, %v1319
    %v1321 = vpop.f32.mrf.mxu0
    %v1322 = vpop.f32.mrf.mxu0
    %v1323 = vadd.f32 %v1274, %v1322
    %v1324 = vpop.f32.mrf.mxu0
    %1325 = vdwg.mxu0
    %vm1326 = vcmask 97280
    %v1327 = vsel %vm1326, %v1312, -inf
    %v1328 = vsel %vm1326, %v1315, -inf
    %v1329 = vmax.f32 %v1327, %v1328
    %v1330 = vrot.slane %v1329, 4
    %v1331 = vmax.f32 %v1329, %v1330
    %v1332 = vrot.slane %v1331, 2
    %v1333 = vmax.f32 %v1331, %v1332
    %v1334 = vrot.slane %v1333, 1
    %v1335 = vmax.f32 %v1333, %v1334
    %v1336 = vsel %vm1326, %v1320, -inf
    %v1337 = vsel %vm1326, %v1323, -inf
    %v1338 = vmax.f32 %v1336, %v1337
    %v1339 = vrot.slane %v1338, 4
    %v1340 = vmax.f32 %v1338, %v1339
    %v1341 = vrot.slane %v1340, 2
    %v1342 = vmax.f32 %v1340, %v1341
    %v1343 = vrot.slane %v1342, 1
    %v1344 = vmax.f32 %v1342, %v1343
    %v1345 = vsub.f32 %v1312, %v1335
    %v1346 = vsub.f32 %v1315, %v1335
    %v1347 = vsub.f32 %v1320, %v1344
    %v1348 = vsub.f32 %v1323, %v1344
    %v1349 = vmul.f32 %v1345, 1.442695
    %v1350 = vpow.pop %v1349
    %v1351 = vmul.f32 %v1346, 1.442695
    %v1352 = vpow.pop %v1351
    %v1353 = vmul.f32 %v1347, 1.442695
    %v1354 = vpow.pop %v1353
    %v1355 = vmul.f32 %v1348, 1.442695
    %v1356 = vpow.pop %v1355
    %v1357 = vsel %vm1326, %v1350, 0.0
    %v1358 = vsel %vm1326, %v1352, 0.0
    %v1359 = vadd.f32 %v1357, %v1358
    %v1360 = vrot.slane %v1359, 4
    %v1361 = vadd.f32 %v1359, %v1360
    %v1362 = vrot.slane %v1361, 2
    %v1363 = vadd.f32 %v1361, %v1362
    %v1364 = vrot.slane %v1363, 1
    %v1365 = vadd.f32 %v1363, %v1364
    %v1366 = vsel %vm1326, %v1354, 0.0
    %v1367 = vsel %vm1326, %v1356, 0.0
    %v1368 = vadd.f32 %v1366, %v1367
    %v1369 = vrot.slane %v1368, 4
    %v1370 = vadd.f32 %v1368, %v1369
    %v1371 = vrot.slane %v1370, 2
    %v1372 = vadd.f32 %v1370, %v1371
    %v1373 = vrot.slane %v1372, 1
    %v1374 = vadd.f32 %v1372, %v1373
    %v1375 = vrcp.pop %v1365
    %v1376 = vrcp.pop %v1374
    %v1377 = vmul.f32 %v1350, %v1375
    %v1378 = vmul.f32 %v1352, %v1375
    %v1379 = vmul.f32 %v1354, %v1376
    %v1380 = vmul.f32 %v1356, %v1376
    %v1381 = vpack.c.bf16 %v1378, %v1377
    %v1382 = vpack.c.bf16 %v1380, %v1379
    %v1383 = vld [vmem:[#allocation4] sm:$0xff]
    %v1384 = vld [vmem:[#allocation4 + $0x8] sm:$0xf]
    %v1385 = vld [vmem:[#allocation4 + $0xc] sm:$0x33]
    %v1386 = vld [vmem:[#allocation4 + $0x14] sm:$0x3]
    %v1391 = vunpack.c.l.b16 %v1383
    %v1392 = vunpack.c.h.b16 %v1383
    %v1393 = vunpack.c.l.b16 %v1384
    %v1394 = vunpack.c.l.b16 %v1385
    %v1395 = vunpack.c.h.b16 %v1385
    %v1396 = vunpack.c.l.b16 %v1386
    %v1397 = vpack.c.b16 %v1394, %v1391
    %v1398 = vpack.c.b16 %v1395, %v1392
    %v1399 = vpack.c.b16 %v1396, %v1393
    %v1401 = vsel %vm1326, %v1381, 0
    %v1404 = vsel %vm1326, %v1382, 0
    %vm1406 = vcmask 1045504
    %v1408 = vsel %vm1406, %v1397, 0
    %v1411 = vsel %vm1406, %v1398, 0
    %v1414 = vsel %vm1406, %v1399, 0
    %1416 = vmatprep.subr.bf16.mxu0 0
    %1417 = vmatpush1.bf16.msra.mxu0 0
    %1418 = vmatprep.subr.bf16.mxu0 0
    %1419 = vmatpush1.bf16.msra.mxu0 0
    %1420 = vmatprep.subr.bf16.mxu0 0
    %1421 = vmatpush1.bf16.msra.mxu0 0
    %1422 = vmatprep.subr.bf16.mxu0 0
    %1423 = vmatpush1.bf16.msra.mxu0 0
    %1424 = vmatprep.subr.bf16.mxu0 0
    %1425 = vmatpush1.bf16.msra.mxu0 0
    %1426 = vmatprep.subr.bf16.mxu0 0
    %1427 = vmatpush1.bf16.msra.mxu0 0
    %1428 = vmatprep.subr.bf16.mxu0 0
    %1429 = vmatpush1.bf16.msra.mxu0 0
    %1430 = vmatprep.subr.bf16.mxu0 %v1411
    %1431 = vmatpush1.bf16.msra.mxu0 %v1408
    %1432 = vmatprep.subr.bf16.mxu0 0
    %1433 = vmatpush2.bf16.msra.mxu0 0
    %1434 = vmatprep.subr.bf16.mxu0 0
    %1435 = vmatpush2.bf16.msra.mxu0 0
    %1436 = vmatprep.subr.bf16.mxu0 0
    %1437 = vmatpush2.bf16.msra.mxu0 0
    %1438 = vmatprep.subr.bf16.mxu0 0
    %1439 = vmatpush2.bf16.msra.mxu0 0
    %1440 = vmatprep.subr.bf16.mxu0 0
    %1441 = vmatpush2.bf16.msra.mxu0 0
    %1442 = vmatprep.subr.bf16.mxu0 0
    %1443 = vmatpush2.bf16.msra.mxu0 0
    %1444 = vmatprep.subr.bf16.mxu0 0
    %1445 = vmatpush2.bf16.msra.mxu0 0
    %1446 = vmatprep.subr.bf16.mxu0 0
    %1447 = vmatpush2.bf16.msra.mxu0 0
    %1448 = vmatprep.mubr.bf16.mxu0 0
    %1449 = vmatmul.mubr.bf16.gmra.mxu0 %v1401
    %v1450 = vpop.f32.mrf.mxu0
    %v1451 = vadd.f32 0.0, %v1450
    %v1452 = vpop.f32.mrf.mxu0
    %v1453 = vadd.f32 0.0, %v1452
    %v1454 = vpop.f32.mrf.mxu0
    %v1455 = vadd.f32 0.0, %v1454
    %v1456 = vpop.f32.mrf.mxu0
    %v1457 = vadd.f32 0.0, %v1456
    %1458 = vmatprep.mubr.bf16.mxu0 0
    %1459 = vmatmul.mubr.bf16.gmra.mxu0 %v1404
    %v1460 = vpop.f32.mrf.mxu0
    %v1461 = vadd.f32 0.0, %v1460
    %v1462 = vpop.f32.mrf.mxu0
    %v1463 = vadd.f32 0.0, %v1462
    %v1464 = vpop.f32.mrf.mxu0
    %v1465 = vadd.f32 0.0, %v1464
    %v1466 = vpop.f32.mrf.mxu0
    %v1467 = vadd.f32 0.0, %v1466
    %1468 = vdwg.mxu0
    %1469 = vmatprep.subr.bf16.mxu0 0
    %1470 = vmatpush1.bf16.msra.mxu0 0
    %1471 = vmatprep.subr.bf16.mxu0 0
    %1472 = vmatpush1.bf16.msra.mxu0 0
    %1473 = vmatprep.subr.bf16.mxu0 0
    %1474 = vmatpush1.bf16.msra.mxu0 0
    %1475 = vmatprep.subr.bf16.mxu0 0
    %1476 = vmatpush1.bf16.msra.mxu0 0
    %1477 = vmatprep.subr.bf16.mxu0 0
    %1478 = vmatpush1.bf16.msra.mxu0 0
    %1479 = vmatprep.subr.bf16.mxu0 0
    %1480 = vmatpush1.bf16.msra.mxu0 0
    %1481 = vmatprep.subr.bf16.mxu0 0
    %1482 = vmatpush1.bf16.msra.mxu0 0
    %1483 = vmatprep.subr.bf16.mxu0 0
    %1484 = vmatpush1.bf16.msra.mxu0 %v1414
    %1485 = vmatprep.subr.bf16.mxu0 0
    %1486 = vmatpush2.bf16.msra.mxu0 0
    %1487 = vmatprep.subr.bf16.mxu0 0
    %1488 = vmatpush2.bf16.msra.mxu0 0
    %1489 = vmatprep.subr.bf16.mxu0 0
    %1490 = vmatpush2.bf16.msra.mxu0 0
    %1491 = vmatprep.subr.bf16.mxu0 0
    %1492 = vmatpush2.bf16.msra.mxu0 0
    %1493 = vmatprep.subr.bf16.mxu0 0
    %1494 = vmatpush2.bf16.msra.mxu0 0
    %1495 = vmatprep.subr.bf16.mxu0 0
    %1496 = vmatpush2.bf16.msra.mxu0 0
    %1497 = vmatprep.subr.bf16.mxu0 0
    %1498 = vmatpush2.bf16.msra.mxu0 0
    %1499 = vmatprep.subr.bf16.mxu0 0
    %1500 = vmatpush2.bf16.msra.mxu0 0
    %1501 = vmatprep.mubr.bf16.mxu0 0
    %1502 = vmatmul.mubr.bf16.gmra.mxu0 %v1401
    %v1503 = vpop.f32.mrf.mxu0
    %v1504 = vadd.f32 0.0, %v1503
    %v1505 = vpop.f32.mrf.mxu0
    %v1506 = vpop.f32.mrf.mxu0
    %v1507 = vadd.f32 0.0, %v1506
    %v1508 = vpop.f32.mrf.mxu0
    %1509 = vmatprep.mubr.bf16.mxu0 0
    %1510 = vmatmul.mubr.bf16.gmra.mxu0 %v1404
    %v1511 = vpop.f32.mrf.mxu0
    %v1512 = vadd.f32 0.0, %v1511
    %v1513 = vpop.f32.mrf.mxu0
    %v1514 = vpop.f32.mrf.mxu0
    %v1515 = vadd.f32 0.0, %v1514
    %v1516 = vpop.f32.mrf.mxu0
    %1517 = vdwg.mxu0
    %v1518 = vmul.f32 %v1451, %v603
    %v1519 = vmul.f32 %v1453, %v654
    %v1520 = vmul.f32 %v1504, %v656
    %v1521 = vmul.f32 %v1455, %v607
    %v1522 = vmul.f32 %v1457, %v658
    %v1523 = vmul.f32 %v1507, %v660
    %v1524 = vmul.f32 %v1461, %v613
    %v1525 = vmul.f32 %v1463, %v664
    %v1526 = vmul.f32 %v1512, %v666
    %v1527 = vmul.f32 %v1465, %v617
    %v1528 = vmul.f32 %v1467, %v668
    %v1529 = vmul.f32 %v1515, %v670
    %v1530 = vadd.f32 %v1518, %v1521
    %v1531 = vrot.slane %v1530, 4
    %v1532 = vadd.f32 %v1530, %v1531
    %v1533 = vrot.slane %v1532, 2
    %v1534 = vadd.f32 %v1532, %v1533
    %v1535 = vrot.slane %v1534, 1
    %v1536 = vadd.f32 %v1534, %v1535
    %v1537 = vadd.f32 %v1519, %v1522
    %v1538 = vrot.slane %v1537, 4
    %v1539 = vadd.f32 %v1537, %v1538
    %v1540 = vrot.slane %v1539, 2
    %v1541 = vadd.f32 %v1539, %v1540
    %v1542 = vrot.slane %v1541, 1
    %v1543 = vadd.f32 %v1541, %v1542
    %v1544 = vadd.f32 %v1520, %v1523
    %v1545 = vrot.slane %v1544, 4
    %v1546 = vadd.f32 %v1544, %v1545
    %v1547 = vrot.slane %v1546, 2
    %v1548 = vadd.f32 %v1546, %v1547
    %v1549 = vrot.slane %v1548, 1
    %v1550 = vadd.f32 %v1548, %v1549
    %v1551 = vadd.f32 %v1524, %v1527
    %v1552 = vrot.slane %v1551, 4
    %v1553 = vadd.f32 %v1551, %v1552
    %v1554 = vrot.slane %v1553, 2
    %v1555 = vadd.f32 %v1553, %v1554
    %v1556 = vrot.slane %v1555, 1
    %v1557 = vadd.f32 %v1555, %v1556
    %v1558 = vadd.f32 %v1525, %v1528
    %v1559 = vrot.slane %v1558, 4
    %v1560 = vadd.f32 %v1558, %v1559
    %v1561 = vrot.slane %v1560, 2
    %v1562 = vadd.f32 %v1560, %v1561
    %v1563 = vrot.slane %v1562, 1
    %v1564 = vadd.f32 %v1562, %v1563
    %v1565 = vadd.f32 %v1526, %v1529
    %v1566 = vrot.slane %v1565, 4
    %v1567 = vadd.f32 %v1565, %v1566
    %v1568 = vrot.slane %v1567, 2
    %v1569 = vadd.f32 %v1567, %v1568
    %v1570 = vrot.slane %v1569, 1
    %v1571 = vadd.f32 %v1569, %v1570
    %v1578 = vcombine.low %v1536, %v1543
    %v1580 = vunpack.c.l.s4 1983009808
    %v1581 = vunpack.c.0.s8 %v1580
    %v1582 = vlaneseq
    %v1583 = vshrl.u32 %v1582, 7
    %v1584 = vsub.s32 %v1581, %v1583
    %v1585 = vrot.slane %v1578, %v1584
    %v1587 = vunpack.c.l.s4 1983009808
    %v1588 = vunpack.c.0.s8 %v1587
    %v1589 = vlaneseq
    %v1590 = vshrl.u32 %v1589, 7
    %v1591 = vsub.s32 %v1588, %v1590
    %v1592 = vrot.slane %v1550, %v1591
    %v1593 = vcombine.low %v1585, %v1592
    %v1594 = vcombine.low %v1557, %v1564
    %v1596 = vunpack.c.l.s4 1983009808
    %v1597 = vunpack.c.0.s8 %v1596
    %v1598 = vlaneseq
    %v1599 = vshrl.u32 %v1598, 7
    %v1600 = vsub.s32 %v1597, %v1599
    %v1601 = vrot.slane %v1594, %v1600
    %v1603 = vunpack.c.l.s4 1983009808
    %v1604 = vunpack.c.0.s8 %v1603
    %v1605 = vlaneseq
    %v1606 = vshrl.u32 %v1605, 7
    %v1607 = vsub.s32 %v1604, %v1606
    %v1608 = vrot.slane %v1571, %v1607
    %v1609 = vcombine.low %v1601, %v1608
    %vm1610 = vcmask 1044484
    %v1611 = vsel %vm1610, %v1593, %v1593
    %vm1612 = vcmask 1046534
    %v1613 = vsel %vm1612, %v1593, %v1611
    %v1614 = vrot.slane %v1609, 7
    %v1615 = vsel %vm741, %v1614, %v1613
    %vm1616 = vcmask 1043459
    %v1617 = vsel %vm1616, %v1614, %v1615
    %vm1618 = vcmask 1045509
    %v1619 = vsel %vm1618, %v1614, %v1617
    %vm1620 = vcmask 1047559
    %v1621 = vsel %vm1620, %v1614, %v1619
    %1623 = vst [vmem:[%s8] sm:$0x3f] %v1621
    // Predicated region
    $region42: #{_emotion_forward.1} parent=1 // pred_check
      _
    $region43: #{_emotion_forward.1} parent=1 // pred_check_branch
      %1625 = sbr.rel (0) target = $region45
    $region44: #{_emotion_forward.1} parent=1 // pred_region
      _
    $region45: #{_emotion_forward.1} parent=1 // pred_fallthru
      _
    // Predicated region
    $region46: #{_emotion_forward.1} parent=1 // pred_check
      _
    $region47: #{_emotion_forward.1} parent=1 // pred_check_branch
      %1627 = sbr.rel (0) target = $region49
    $region48: #{_emotion_forward.1} parent=1 // pred_region
      _
    $region49: #{_emotion_forward.1} parent=1 // pred_fallthru
      _
    %1628 = vsyncpa [#allocation3], 1
    %1629 = vsyncpa [#allocation5], 1

</llo_original>
